<compile_context>
chip_gen: v7x
topology: tpu7x:2x2x1
jax: 0.10.0
libtpu: 0.0.40
codegen_flags: <defaults>
</compile_context>

<pallas_src>
from functools import partial

import jax
import jax.numpy as jnp
from jax import lax
from jax.experimental import pallas as pl
from jax.experimental.pallas import tpu as pltpu


def _attention_kernel(x_ref, wqkv_ref, wproj_ref, bproj_ref, o_ref, acc_ref,
                      *, scale):
    # Grid: (batch, head).  One step = one (batch, head) pair.
    h = pl.program_id(1)
    last_h = pl.num_programs(1) - 1

    cdt = x_ref.dtype                      # MXU-input compute dtype (bf16)
    x = x_ref[...]                         # (N, C)

    # Per-head q/k/v projections: (N, C) @ (C, hd); weights are pre-transposed.
    q = jnp.dot(x, wqkv_ref[0], preferred_element_type=jnp.float32).astype(cdt)
    k = jnp.dot(x, wqkv_ref[1], preferred_element_type=jnp.float32).astype(cdt)
    v = jnp.dot(x, wqkv_ref[2], preferred_element_type=jnp.float32).astype(cdt)

    # q @ k^T without an explicit transpose: contract the shared last dim.
    s = lax.dot_general(q, k, (((1,), (1,)), ((), ())),
                        preferred_element_type=jnp.float32) * scale   # (N, N) f32
    s = s - jnp.max(s, axis=-1, keepdims=True)
    p = jnp.exp(s)
    p = p * pl.reciprocal(jnp.sum(p, axis=-1, keepdims=True), approx=True)

    head = jnp.dot(p.astype(cdt), v,
                   preferred_element_type=jnp.float32).astype(cdt)    # (N, hd)

    # Fold this head straight into the output projection (no concat):
    #   y += head_h @ Wproj^T[h*hd:(h+1)*hd, :]
    contrib = jnp.dot(head, wproj_ref[...],
                      preferred_element_type=jnp.float32)             # (N, C) f32

    @pl.when(h == 0)
    def _():
        acc_ref[...] = jnp.zeros_like(acc_ref)

    acc_ref[...] += contrib

    @pl.when(h == last_h)
    def _():
        o_ref[...] = (acc_ref[...] + bproj_ref[...].astype(jnp.float32)
                      ).astype(o_ref.dtype)


def attention_forward(x, wqkv, wproj, bproj, *, num_heads,
                      compute_dtype=jnp.bfloat16):
    B, N, C = x.shape
    hd = C // num_heads
    scale = hd ** (-0.5)

    # One-time XLA-side relayout: nothing is transposed inside the kernel.
    #   wqkv (3C, C) -> (H, 3, C, hd): per-head [Wq^T | Wk^T | Wv^T] slabs.
    wqkv_h = jnp.transpose(wqkv.reshape(3, num_heads, hd, C), (1, 0, 3, 2))
    #   wproj (C, C) -> Wproj^T rows grouped per head: (H, hd, C).
    wproj_h = jnp.transpose(wproj, (1, 0)).reshape(num_heads, hd, C)
    bproj2d = bproj.reshape(1, C).astype(jnp.float32)

    xc = x.astype(compute_dtype)
    wqkv_h = wqkv_h.astype(compute_dtype)
    wproj_h = wproj_h.astype(compute_dtype)

    kernel = partial(_attention_kernel, scale=scale)

    # TODO(synk): for real ViT sizes (N=197/577, C=768+) pad N to a multiple of
    # 128 with key-masked softmax and tile Q rows flash-style; the full (N, N)
    # attn tile per head is fine at these sizes.
    return pl.pallas_call(
        kernel,
        out_shape=jax.ShapeDtypeStruct((B, N, C), x.dtype),
        grid_spec=pltpu.PrefetchScalarGridSpec(
            num_scalar_prefetch=0,
            grid=(B, num_heads),
            in_specs=[
                # x tile: resident across the head axis (index map constant in h)
                pl.BlockSpec((None, N, C), lambda b, h: (b, 0, 0)),
                # per-head qkv weight slab (3, C, hd)
                pl.BlockSpec((None, 3, C, hd), lambda b, h: (h, 0, 0, 0)),
                # per-head slice of Wproj^T rows (hd, C)
                pl.BlockSpec((None, hd, C), lambda b, h: (h, 0, 0)),
                # proj bias
                pl.BlockSpec((1, C), lambda b, h: (0, 0)),
            ],
            out_specs=pl.BlockSpec((None, N, C), lambda b, h: (b, 0, 0)),
            scratch_shapes=[pltpu.VMEM((N, C), jnp.float32)],
        ),
        compiler_params=pltpu.CompilerParams(
            dimension_semantics=("parallel", "arbitrary"),
            vmem_limit_bytes=32 * 1024 * 1024,
        ),
    )(xc, wqkv_h, wproj_h, bproj2d)


def attention_reference(x, wqkv, wproj, bproj, *, num_heads):
    """Pure-JAX f32 reference mirroring the PyTorch forward exactly."""
    B, N, C = x.shape
    hd = C // num_heads
    scale = hd ** (-0.5)
    qkv = x @ wqkv.T                                           # (B, N, 3C)
    qkv = qkv.reshape(B, N, 3, num_heads, hd).transpose(2, 0, 3, 1, 4)
    q, k, v = qkv[0], qkv[1], qkv[2]                           # (B, H, N, hd)
    attn = (q @ jnp.swapaxes(k, -2, -1)) * scale               # (B, H, N, N)
    attn = jax.nn.softmax(attn, axis=-1)
    out = (attn @ v).transpose(0, 2, 1, 3).reshape(B, N, C)
    return out @ wproj.T + bproj


if __name__ == "__main__":
    B, N, C, H = 2, 8, 32, 8

    key = jax.random.PRNGKey(0)
    kx, kw1, kw2, kb = jax.random.split(key, 4)

    x = jax.random.normal(kx, (B, N, C), dtype=jnp.float32)
    # Shapes match nn.Linear(dim, dim*3) / nn.Linear(dim, dim).
    wqkv = jax.random.normal(kw1, (3 * C, C), dtype=jnp.float32) * 0.05
    wproj = jax.random.normal(kw2, (C, C), dtype=jnp.float32) * 0.05
    bproj = jax.random.normal(kb, (C,), dtype=jnp.float32) * 0.05

    out = attention_forward(x, wqkv, wproj, bproj, num_heads=H)
    out = jax.block_until_ready(out)

    ref = attention_reference(x, wqkv, wproj, bproj, num_heads=H)
    assert out.shape == (B, N, C)
    # bf16 MXU inputs + approx reciprocal -> loosened tolerance vs f32 reference.
    assert jnp.allclose(out, ref, atol=2e-2, rtol=2e-2), "mismatch vs reference"

    print("KERNEL_OK")
</pallas_src>

<mosaic_0001>
module attributes {stable_mosaic.version = 11 : i64} {
  func.func @_attention_kernel(%arg0: i32, %arg1: i32, %arg2: memref<1x8x32xbf16, #tpu.memory_space<vmem>>, %arg3: memref<1x3x32x4xbf16, #tpu.memory_space<vmem>>, %arg4: memref<1x4x32xbf16, #tpu.memory_space<vmem>>, %arg5: memref<1x32xf32, #tpu.memory_space<vmem>>, %arg6: memref<1x8x32xf32, #tpu.memory_space<vmem>>, %arg7: memref<8x32xf32, #tpu.memory_space<vmem>>) attributes {dimension_semantics = [#tpu.dimension_semantics<parallel>, #tpu.dimension_semantics<arbitrary>], iteration_bounds = array<i64: 2, 8>, scalar_prefetch = 0 : i64, scratch_operands = 1 : i64, tpu.core_type = #tpu.core_type<tc>, window_params = [{transform_indices = @transform_0, window_bounds = array<i64: 1, 8, 32>}, {transform_indices = @transform_1, window_bounds = array<i64: 1, 3, 32, 4>}, {transform_indices = @transform_2, window_bounds = array<i64: 1, 4, 32>}, {pipeline_mode = #tpu.pipeline_mode<synchronous>, transform_indices = @transform_3, window_bounds = array<i64: 1, 32>}, {transform_indices = @transform_4, window_bounds = array<i64: 1, 8, 32>}]} {
    %c0 = arith.constant 0 : index
    %c0_0 = arith.constant 0 : index
    %c0_1 = arith.constant 0 : index
    %0 = vector.load %arg2[%c0, %c0_0, %c0_1] : memref<1x8x32xbf16, #tpu.memory_space<vmem>>, vector<1x8x32xbf16>
    %1 = vector.shape_cast %0 : vector<1x8x32xbf16> to vector<8x32xbf16>
    %c0_2 = arith.constant 0 : index
    %c0_3 = arith.constant 0 : index
    %c0_4 = arith.constant 0 : index
    %c0_5 = arith.constant 0 : index
    %2 = vector.load %arg3[%c0_2, %c0_3, %c0_4, %c0_5] : memref<1x3x32x4xbf16, #tpu.memory_space<vmem>>, vector<1x1x32x4xbf16>
    %3 = vector.shape_cast %2 : vector<1x1x32x4xbf16> to vector<32x4xbf16>
    %cst = arith.constant dense<0.000000e+00> : vector<8x4xf32>
    %4 = tpu.matmul %1, %3, %cst {dimension_numbers = #tpu.dot_dimension_numbers<[1], [0], [0], [1], [0, 0, 1, 1], [], []>} : vector<8x32xbf16>, vector<32x4xbf16>, vector<8x4xf32> -> vector<8x4xf32>
    %5 = arith.truncf %4 : vector<8x4xf32> to vector<8x4xbf16>
    %c0_6 = arith.constant 0 : index
    %c1 = arith.constant 1 : index
    %c0_7 = arith.constant 0 : index
    %c0_8 = arith.constant 0 : index
    %6 = vector.load %arg3[%c0_6, %c1, %c0_7, %c0_8] : memref<1x3x32x4xbf16, #tpu.memory_space<vmem>>, vector<1x1x32x4xbf16>
    %7 = vector.shape_cast %6 : vector<1x1x32x4xbf16> to vector<32x4xbf16>
    %cst_9 = arith.constant dense<0.000000e+00> : vector<8x4xf32>
    %8 = tpu.matmul %1, %7, %cst_9 {dimension_numbers = #tpu.dot_dimension_numbers<[1], [0], [0], [1], [0, 0, 1, 1], [], []>} : vector<8x32xbf16>, vector<32x4xbf16>, vector<8x4xf32> -> vector<8x4xf32>
    %9 = arith.truncf %8 : vector<8x4xf32> to vector<8x4xbf16>
    %c0_10 = arith.constant 0 : index
    %c2 = arith.constant 2 : index
    %c0_11 = arith.constant 0 : index
    %c0_12 = arith.constant 0 : index
    %10 = vector.load %arg3[%c0_10, %c2, %c0_11, %c0_12] : memref<1x3x32x4xbf16, #tpu.memory_space<vmem>>, vector<1x1x32x4xbf16>
    %11 = vector.shape_cast %10 : vector<1x1x32x4xbf16> to vector<32x4xbf16>
    %cst_13 = arith.constant dense<0.000000e+00> : vector<8x4xf32>
    %12 = tpu.matmul %1, %11, %cst_13 {dimension_numbers = #tpu.dot_dimension_numbers<[1], [0], [0], [1], [0, 0, 1, 1], [], []>} : vector<8x32xbf16>, vector<32x4xbf16>, vector<8x4xf32> -> vector<8x4xf32>
    %13 = arith.truncf %12 : vector<8x4xf32> to vector<8x4xbf16>
    %cst_14 = arith.constant dense<0.000000e+00> : vector<8x8xf32>
    %14 = tpu.matmul %5, %9, %cst_14 {dimension_numbers = #tpu.dot_dimension_numbers<[1], [1], [0], [0], [0, 0, 1, 0], [], []>} : vector<8x4xbf16>, vector<8x4xbf16>, vector<8x8xf32> -> vector<8x8xf32>
    %cst_15 = arith.constant 5.000000e-01 : f32
    %15 = vector.broadcast %cst_15 : f32 to vector<8x8xf32>
    %16 = arith.mulf %14, %15 : vector<8x8xf32>
    %cst_16 = arith.constant dense<0xFF800000> : vector<8xf32>
    %17 = vector.multi_reduction <maximumf>, %16, %cst_16 [1] : vector<8x8xf32> to vector<8xf32>
    %18 = vector.shape_cast %17 : vector<8xf32> to vector<8x1xf32>
    %19 = vector.broadcast %18 : vector<8x1xf32> to vector<8x8xf32>
    %20 = arith.subf %16, %19 : vector<8x8xf32>
    %21 = math.exp %20 : vector<8x8xf32>
    %cst_17 = arith.constant dense<0.000000e+00> : vector<8xf32>
    %22 = vector.multi_reduction <add>, %21, %cst_17 [1] : vector<8x8xf32> to vector<8xf32>
    %23 = vector.shape_cast %22 : vector<8xf32> to vector<8x1xf32>
    %24 = tpu.reciprocal %23 {approx = true} : vector<8x1xf32> -> vector<8x1xf32>
    %25 = vector.broadcast %24 : vector<8x1xf32> to vector<8x8xf32>
    %26 = arith.mulf %21, %25 : vector<8x8xf32>
    %27 = arith.truncf %26 : vector<8x8xf32> to vector<8x8xbf16>
    %cst_18 = arith.constant dense<0.000000e+00> : vector<8x4xf32>
    %28 = tpu.matmul %27, %13, %cst_18 {dimension_numbers = #tpu.dot_dimension_numbers<[1], [0], [0], [1], [0, 0, 1, 1], [], []>} : vector<8x8xbf16>, vector<8x4xbf16>, vector<8x4xf32> -> vector<8x4xf32>
    %29 = arith.truncf %28 : vector<8x4xf32> to vector<8x4xbf16>
    %c0_19 = arith.constant 0 : index
    %c0_20 = arith.constant 0 : index
    %c0_21 = arith.constant 0 : index
    %30 = vector.load %arg4[%c0_19, %c0_20, %c0_21] : memref<1x4x32xbf16, #tpu.memory_space<vmem>>, vector<1x4x32xbf16>
    %31 = vector.shape_cast %30 : vector<1x4x32xbf16> to vector<4x32xbf16>
    %cst_22 = arith.constant dense<0.000000e+00> : vector<8x32xf32>
    %32 = tpu.matmul %29, %31, %cst_22 {dimension_numbers = #tpu.dot_dimension_numbers<[1], [0], [0], [1], [0, 0, 1, 1], [], []>} : vector<8x4xbf16>, vector<4x32xbf16>, vector<8x32xf32> -> vector<8x32xf32>
    %c0_i32 = arith.constant 0 : i32
    %33 = arith.cmpi eq, %arg1, %c0_i32 : i32
    %34 = arith.extui %33 : i1 to i32
    %c0_i32_23 = arith.constant 0 : i32
    %35 = arith.cmpi ne, %34, %c0_i32_23 : i32
    scf.if %35 {
      %cst_29 = arith.constant 0.000000e+00 : f32
      %42 = vector.broadcast %cst_29 : f32 to vector<8x32xf32>
      %c0_30 = arith.constant 0 : index
      %c0_31 = arith.constant 0 : index
      %43 = vector.load %arg7[%c0_30, %c0_31] : memref<8x32xf32, #tpu.memory_space<vmem>>, vector<8x32xf32>
      tpu.vector_store %arg7[%c0_30, %c0_31], %42 {strides = array<i32>} : memref<8x32xf32, #tpu.memory_space<vmem>>, vector<8x32xf32>,
    } else {
    }
    %c0_24 = arith.constant 0 : index
    %c0_25 = arith.constant 0 : index
    %36 = vector.load %arg7[%c0_24, %c0_25] : memref<8x32xf32, #tpu.memory_space<vmem>>, vector<8x32xf32>
    %37 = arith.addf %36, %32 : vector<8x32xf32>
    %c0_26 = arith.constant 0 : index
    %c0_27 = arith.constant 0 : index
    %38 = vector.load %arg7[%c0_26, %c0_27] : memref<8x32xf32, #tpu.memory_space<vmem>>, vector<8x32xf32>
    tpu.vector_store %arg7[%c0_26, %c0_27], %37 {strides = array<i32>} : memref<8x32xf32, #tpu.memory_space<vmem>>, vector<8x32xf32>,
    %c7_i32 = arith.constant 7 : i32
    %39 = arith.cmpi eq, %arg1, %c7_i32 : i32
    %40 = arith.extui %39 : i1 to i32
    %c0_i32_28 = arith.constant 0 : i32
    %41 = arith.cmpi ne, %40, %c0_i32_28 : i32
    scf.if %41 {
      %c0_29 = arith.constant 0 : index
      %c0_30 = arith.constant 0 : index
      %42 = vector.load %arg7[%c0_29, %c0_30] : memref<8x32xf32, #tpu.memory_space<vmem>>, vector<8x32xf32>
      %c0_31 = arith.constant 0 : index
      %c0_32 = arith.constant 0 : index
      %43 = vector.load %arg5[%c0_31, %c0_32] : memref<1x32xf32, #tpu.memory_space<vmem>>, vector<1x32xf32>
      %44 = vector.broadcast %43 : vector<1x32xf32> to vector<8x32xf32>
      %45 = arith.addf %42, %44 : vector<8x32xf32>
      %c0_33 = arith.constant 0 : index
      %c0_34 = arith.constant 0 : index
      %c0_35 = arith.constant 0 : index
      %46 = vector.load %arg6[%c0_33, %c0_34, %c0_35] : memref<1x8x32xf32, #tpu.memory_space<vmem>>, vector<1x8x32xf32>
      %47 = vector.shape_cast %46 : vector<1x8x32xf32> to vector<8x32xf32>
      %48 = vector.shape_cast %45 : vector<8x32xf32> to vector<1x8x32xf32>
      tpu.vector_store %arg6[%c0_33, %c0_34, %c0_35], %48 {strides = array<i32>} : memref<1x8x32xf32, #tpu.memory_space<vmem>>, vector<1x8x32xf32>,
    } else {
    }
    return
  }
  func.func @transform_0(%arg0: i32, %arg1: i32) -> (i32, i32, i32) {
    %c0_i32 = arith.constant 0 : i32
    %c0_i32_0 = arith.constant 0 : i32
    %c0_i32_1 = arith.constant 0 : i32
    return %arg0, %c0_i32, %c0_i32_0 : i32, i32, i32
  }
  func.func @transform_1(%arg0: i32, %arg1: i32) -> (i32, i32, i32, i32) {
    %c0_i32 = arith.constant 0 : i32
    %c0_i32_0 = arith.constant 0 : i32
    %c0_i32_1 = arith.constant 0 : i32
    %c0_i32_2 = arith.constant 0 : i32
    return %arg1, %c0_i32, %c0_i32_0, %c0_i32_1 : i32, i32, i32, i32
  }
  func.func @transform_2(%arg0: i32, %arg1: i32) -> (i32, i32, i32) {
    %c0_i32 = arith.constant 0 : i32
    %c0_i32_0 = arith.constant 0 : i32
    %c0_i32_1 = arith.constant 0 : i32
    return %arg1, %c0_i32, %c0_i32_0 : i32, i32, i32
  }
  func.func @transform_3(%arg0: i32, %arg1: i32) -> (i32, i32) {
    %c0_i32 = arith.constant 0 : i32
    %c0_i32_0 = arith.constant 0 : i32
    %c0_i32_1 = arith.constant 0 : i32
    return %c0_i32, %c0_i32_0 : i32, i32
  }
  func.func @transform_4(%arg0: i32, %arg1: i32) -> (i32, i32, i32) {
    %c0_i32 = arith.constant 0 : i32
    %c0_i32_0 = arith.constant 0 : i32
    %c0_i32_1 = arith.constant 0 : i32
    return %arg0, %c0_i32, %c0_i32_0 : i32, i32, i32
  }
}

</mosaic_0001>

<llo_original>
// kernel: tpu_custom_call.1
$region0: #{tpu_custom_call.1}
  #allocation0 [shape = 'u32[]', space=smem, size = 0x4, offset = 0x4, fixed_abs, tag = 'smem constant byte address 0x4 - core index']
  #allocation1 [shape = 'u32[144,128]{1,0:T(1,128)}', space=vmem, size = 0x12000, scoped, tag = 'internal scratch']
  #allocation2 [shape = 'f32[8,32]{1,0:T(8,128)}', space=vmem, size = 0x1000, scoped, tag = 'scratch operand']
  %s0 = inlined_call_operand.vmem [shape: bf16[2,8,32], index: 0, kind: input, shape index: {}]
  %s1 = inlined_call_operand.vmem [shape: bf16[8,3,32,4], index: 1, kind: input, shape index: {}]
  %s2 = inlined_call_operand.vmem [shape: bf16[8,4,32], index: 2, kind: input, shape index: {}]
  %s3 = inlined_call_operand.vmem [shape: f32[1,32], index: 3, kind: input, shape index: {}]
  %s4 = inlined_call_operand.hbm [shape: f32[2,8,32], index: 4, kind: output, shape index: {}]
  %s5 = sld [smem:[#allocation0]]
  $region57: #{tpu_custom_call.1} parent=0
    _
  %s7 = ssub.s32 1, %s5
  %s8 = scalar_select 0, %s7, %s5
  $region1: #{tpu_custom_call.1} parent=0
    #allocation3 [shape = 'u8[8192]{0}', space=vmem, size = 0x2000, scoped, tag = 'output window, operand 0']
    #allocation4 [shape = 's32[2]{0}', space=sflag, size = 0x8, scoped, tag = 'scoped memory for tpu_custom_call.1']
    %9 = vsyncpa [#allocation4], 0
    %s10 = scalar_lea.sflag [#allocation4], 1
    %11 = vsyncpa %s10, 0
    loop: start=0, step=1, limit=18
    $region2: #{tpu_custom_call.1} parent=1 // loop_pre_header
      _
    $region3: #{tpu_custom_call.1} parent=1 // loop_header
      %s13 = sphi 0, %s17
      %p14 = scmp.ge.s32.totalorder %s13, 18
      %s20 = sphi 0, %s32
      %s21 = sphi 0, %s28
      %s22 = sphi 0, %s20
      %s23 = sphi 0, %s21
      %s24 = sphi 0, %s22
      %s25 = sphi 0, %s23
      %s35 = sphi 0, %s37
      %s38 = sphi 0, %s35
      %s39 = sphi 0, %s38
      %s55 = sphi 0, %s39
      %s61 = sphi 0, %s63
      %s64 = sphi 0, %s61
      %s65 = sphi 0, %s64
      %s81 = sphi 0, %s65
      %s87 = sphi 0, %s89
      %s90 = sphi 0, %s87
      %s91 = sphi 0, %s90
      %s107 = sphi 0, %s91
      %s111 = sphi 0, %s111
      %s113 = sphi 0, %s111
      %s114 = sphi 0, %s113
      %s128 = sphi 0, %s114
      %s134 = sphi 0, %s136
      %s137 = sphi 0, %s134
      %s138 = sphi 0, %s137
      %s154 = sphi 0, %s138
    $region4: #{tpu_custom_call.1} parent=1 // loop_header_branch
      %16 = sbr.rel (%p14) target = $region8
    $region5: #{tpu_custom_call.1} parent=1 // loop_body
      %s18 = ssub.s32 %s13, 1
      %s19 = ssub.s32 %s13, 2
      %s26 = sadd.s32 1, %s21
      %p27 = scmp.ge.s32.totalorder %s26, 8
      %s28 = scalar_select %p27, 0, %s26
      %s29 = sadd.s32 1, %s20
      %s30 = scalar_select %p27, %s29, %s20
      %p31 = scmp.ge.s32.totalorder %s30, 2
      %s32 = scalar_select %p31, 0, %s30
      %s33 = ssub.s32 %s20, %s32
      %p34 = scmp.eq.s32.totalorder %s33, 0
      %s36 = sadd.s32 %s35, 1
      %s37 = scalar_select %p34, %s35, %s36
      %p40 = pneg %p34
      %p41 = scmp.eq.s32.totalorder %s13, 15
      %p42 = por %p40, %p41
      %p43 = scmp.ne.s32.totalorder %s35, %s38
      %p44 = scmp.eq.s32.totalorder %s13, 0
      %p45 = por %p43, %p44
      %p46 = scmp.ne.s32.totalorder %s35, %s38
      %p47 = scmp.eq.s32.totalorder %s18, 15
      %p48 = por %p46, %p47
      %p49 = scmp.ne.s32.totalorder %s38, %s39
      %p50 = scmp.eq.s32.totalorder %s18, 0
      %p51 = por %p49, %p50
      %p52 = scmp.ne.s32.totalorder %s38, %s39
      %p53 = scmp.eq.s32.totalorder %s19, 15
      %p54 = por %p52, %p53
      %p56 = scmp.ne.s32.totalorder %s39, %s55
      %p57 = scmp.eq.s32.totalorder %s19, 0
      %p58 = por %p56, %p57
      %s59 = ssub.s32 %s21, %s28
      %p60 = scmp.eq.s32.totalorder %s59, 0
      %s62 = sadd.s32 %s61, 1
      %s63 = scalar_select %p60, %s61, %s62
      %p66 = pneg %p60
      %p67 = scmp.eq.s32.totalorder %s13, 15
      %p68 = por %p66, %p67
      %p69 = scmp.ne.s32.totalorder %s61, %s64
      %p70 = scmp.eq.s32.totalorder %s13, 0
      %p71 = por %p69, %p70
      %p72 = scmp.ne.s32.totalorder %s61, %s64
      %p73 = scmp.eq.s32.totalorder %s18, 15
      %p74 = por %p72, %p73
      %p75 = scmp.ne.s32.totalorder %s64, %s65
      %p76 = scmp.eq.s32.totalorder %s18, 0
      %p77 = por %p75, %p76
      %p78 = scmp.ne.s32.totalorder %s64, %s65
      %p79 = scmp.eq.s32.totalorder %s19, 15
      %p80 = por %p78, %p79
      %p82 = scmp.ne.s32.totalorder %s65, %s81
      %p83 = scmp.eq.s32.totalorder %s19, 0
      %p84 = por %p82, %p83
      %s85 = ssub.s32 %s21, %s28
      %p86 = scmp.eq.s32.totalorder %s85, 0
      %s88 = sadd.s32 %s87, 1
      %s89 = scalar_select %p86, %s87, %s88
      %p92 = pneg %p86
      %p93 = scmp.eq.s32.totalorder %s13, 15
      %p94 = por %p92, %p93
      %p95 = scmp.ne.s32.totalorder %s87, %s90
      %p96 = scmp.eq.s32.totalorder %s13, 0
      %p97 = por %p95, %p96
      %p98 = scmp.ne.s32.totalorder %s87, %s90
      %p99 = scmp.eq.s32.totalorder %s18, 15
      %p100 = por %p98, %p99
      %p101 = scmp.ne.s32.totalorder %s90, %s91
      %p102 = scmp.eq.s32.totalorder %s18, 0
      %p103 = por %p101, %p102
      %p104 = scmp.ne.s32.totalorder %s90, %s91
      %p105 = scmp.eq.s32.totalorder %s19, 15
      %p106 = por %p104, %p105
      %p108 = scmp.ne.s32.totalorder %s91, %s107
      %p109 = scmp.eq.s32.totalorder %s19, 0
      %p110 = por %p108, %p109
      %s112 = sadd.s32 %s111, 1
      %p115 = scmp.eq.s32.totalorder %s13, 15
      %p116 = scmp.ne.s32.totalorder %s111, %s113
      %p117 = scmp.eq.s32.totalorder %s13, 0
      %p118 = por %p116, %p117
      %p119 = scmp.ne.s32.totalorder %s111, %s113
      %p120 = scmp.eq.s32.totalorder %s18, 15
      %p121 = por %p119, %p120
      %p122 = scmp.ne.s32.totalorder %s113, %s114
      %p123 = scmp.eq.s32.totalorder %s18, 0
      %p124 = por %p122, %p123
      %p125 = scmp.ne.s32.totalorder %s113, %s114
      %p126 = scmp.eq.s32.totalorder %s19, 15
      %p127 = por %p125, %p126
      %p129 = scmp.ne.s32.totalorder %s114, %s128
      %p130 = scmp.eq.s32.totalorder %s19, 0
      %p131 = por %p129, %p130
      %s132 = ssub.s32 %s20, %s32
      %p133 = scmp.eq.s32.totalorder %s132, 0
      %s135 = sadd.s32 %s134, 1
      %s136 = scalar_select %p133, %s134, %s135
      %p139 = pneg %p133
      %p140 = scmp.eq.s32.totalorder %s13, 15
      %p141 = por %p139, %p140
      %p142 = scmp.ne.s32.totalorder %s134, %s137
      %p143 = scmp.eq.s32.totalorder %s13, 0
      %p144 = por %p142, %p143
      %p145 = scmp.ne.s32.totalorder %s134, %s137
      %p146 = scmp.eq.s32.totalorder %s18, 15
      %p147 = por %p145, %p146
      %p148 = scmp.ne.s32.totalorder %s137, %s138
      %p149 = scmp.eq.s32.totalorder %s18, 0
      %p150 = por %p148, %p149
      %p151 = scmp.ne.s32.totalorder %s137, %s138
      %p152 = scmp.eq.s32.totalorder %s19, 15
      %p153 = por %p151, %p152
      %p155 = scmp.ne.s32.totalorder %s138, %s154
      %p156 = scmp.eq.s32.totalorder %s19, 0
      %p157 = por %p155, %p156
      %p158 = scmp.le.s32.totalorder 1, %s13
      %p159 = scmp.lt.s32.totalorder %s13, 17
      %p160 = pnand %p158, %p159
      %p161 = pneg %p160
      // Predicated region
      $region9: #{tpu_custom_call.1} parent=5 // pred_check
        _
      $region10: #{tpu_custom_call.1} parent=5 // pred_check_branch
        %163 = sbr.rel (%p160) target = $region12
      $region11: #{tpu_custom_call.1} parent=5 // pred_region
        %s164 = ssub.s32 %s13, 1
        // Predicated region
        $region13: #{tpu_custom_call.1} parent=11 // pred_check
          %p165 = pneg %p124
        $region14: #{tpu_custom_call.1} parent=11 // pred_check_branch
          %167 = sbr.rel (%p165) target = $region16
        $region15: #{tpu_custom_call.1} parent=11 // pred_region
          _
        $region16: #{tpu_custom_call.1} parent=11 // pred_fallthru
          _
      $region12: #{tpu_custom_call.1} parent=5 // pred_fallthru
        _
      %p168 = scmp.lt.s32.totalorder %s13, 16
      // Predicated region
      $region17: #{tpu_custom_call.1} parent=5 // pred_check
        %p169 = pneg %p168
      $region18: #{tpu_custom_call.1} parent=5 // pred_check_branch
        %171 = sbr.rel (%p169) target = $region20
      $region19: #{tpu_custom_call.1} parent=5 // pred_region
        // Predicated region
        $region21: #{tpu_custom_call.1} parent=19 // pred_check
          %p172 = pneg %p45
        $region22: #{tpu_custom_call.1} parent=19 // pred_check_branch
          %174 = sbr.rel (%p172) target = $region24
        $region23: #{tpu_custom_call.1} parent=19 // pred_region
          %p175 = scmp.lt.s32.totalorder %s20, 1
          %s176 = scalar_select %p175, %s20, 1
          %s177 = smul.addr %s176, 4
          %s178 = scalar_lea.vmem %s0, %s177
        $region24: #{tpu_custom_call.1} parent=19 // pred_fallthru
          _
        // Predicated region
        $region25: #{tpu_custom_call.1} parent=19 // pred_check
          %p179 = pneg %p71
        $region26: #{tpu_custom_call.1} parent=19 // pred_check_branch
          %181 = sbr.rel (%p179) target = $region28
        $region27: #{tpu_custom_call.1} parent=19 // pred_region
          %p182 = scmp.lt.s32.totalorder %s21, 7
          %s183 = scalar_select %p182, %s21, 7
          %s184 = smul.addr %s183, 12
          %s185 = smul.addr %s184, 4
          %s186 = scalar_lea.vmem %s1, %s185
        $region28: #{tpu_custom_call.1} parent=19 // pred_fallthru
          _
        // Predicated region
        $region29: #{tpu_custom_call.1} parent=19 // pred_check
          %p187 = pneg %p97
        $region30: #{tpu_custom_call.1} parent=19 // pred_check_branch
          %189 = sbr.rel (%p187) target = $region32
        $region31: #{tpu_custom_call.1} parent=19 // pred_region
          %p190 = scmp.lt.s32.totalorder %s21, 7
          %s191 = scalar_select %p190, %s21, 7
          %s192 = smul.addr %s191, 2
          %s193 = scalar_lea.vmem %s2, %s192
        $region32: #{tpu_custom_call.1} parent=19 // pred_fallthru
          _
      $region20: #{tpu_custom_call.1} parent=5 // pred_fallthru
        _
      %p194 = scmp.le.s32.totalorder 1, %s13
      %p195 = scmp.lt.s32.totalorder %s13, 17
      %p196 = pnand %p194, %p195
      %p197 = pneg %p196
      // Predicated region
      $region33: #{tpu_custom_call.1} parent=5 // pred_check
        _
      $region34: #{tpu_custom_call.1} parent=5 // pred_check_branch
        %199 = sbr.rel (%p196) target = $region36
      $region35: #{tpu_custom_call.1} parent=5 // pred_region
        %s200 = ssub.s32 %s13, 1
        %p201 = scmp.lt.s32.totalorder %s22, 1
        %s202 = scalar_select %p201, %s22, 1
        %s203 = smul.addr %s202, 4
        %s204 = scalar_lea.vmem %s0, %s203
        %p205 = pneg %p51
        %p206 = pneg %p48
        %p207 = scmp.lt.s32.totalorder %s23, 7
        %s208 = scalar_select %p207, %s23, 7
        %s209 = smul.addr %s208, 12
        %s210 = smul.addr %s209, 4
        %s211 = scalar_lea.vmem %s1, %s210
        %p212 = pneg %p77
        %p213 = pneg %p74
        %p214 = scmp.lt.s32.totalorder %s23, 7
        %s215 = scalar_select %p214, %s23, 7
        %s216 = smul.addr %s215, 2
        %s217 = scalar_lea.vmem %s2, %s216
        %p218 = pneg %p103
        %p219 = pneg %p100
        %p220 = pneg %p124
        %p221 = pneg %p121
        %p222 = pneg %p150
        %p223 = pneg %p147
        %s224 = sand.u32 %s137, 1
        %s225 = scalar_lea.sflag [#allocation4], %s224
        %s226 = sand.u32 %s137, 1
        %s227 = smul.addr %s226, 8
        %s228 = scalar_lea.vmem [#allocation3], %s227
        %p229 = scmp.lt.s32.totalorder %s22, 1
        %s230 = scalar_select %p229, %s22, 1
        %s231 = smul.addr %s230, 4
        %s232 = scalar_lea.vmem %s0, %s231
        %p233 = scmp.lt.s32.totalorder %s23, 7
        %s234 = scalar_select %p233, %s23, 7
        %s235 = smul.addr %s234, 12
        %s236 = smul.addr %s235, 4
        %s237 = scalar_lea.vmem %s1, %s236
        %p238 = scmp.lt.s32.totalorder %s23, 7
        %s239 = scalar_select %p238, %s23, 7
        %s240 = smul.addr %s239, 2
        %s241 = scalar_lea.vmem %s2, %s240
        %v243 = vld [vmem:[%s232] sm:$0xf]
        %v244 = vld [vmem:[%s237] sm:$0xf]
        %v245 = vld [vmem:[%s237 + $0x4] sm:$0xf]
        %v246 = vld [vmem:[%s237 + $0x8] sm:$0xf]
        %v247 = vld [vmem:[%s237 + $0xc] sm:$0xf]
        %v252 = vunpack.c.l.b16 %v244
        %v253 = vunpack.c.l.b16 %v245
        %v254 = vunpack.c.l.b16 %v246
        %v255 = vunpack.c.l.b16 %v247
        %v256 = vpack.c.b16 %v253, %v252
        %v257 = vpack.c.b16 %v255, %v254
        %vm260 = vcmask 261120
        %v262 = vsel %vm260, %v243, 0
        %264 = vmatprep.subr.bf16.mxu0 0
        %265 = vmatpush1.bf16.msra.mxu0 %v256
        %266 = vmatprep.subr.bf16.mxu0 0
        %267 = vmatpush1.bf16.msra.mxu0 %v257
        %268 = vmatprep.subr.bf16.mxu0 0
        %269 = vmatpush1.bf16.msra.mxu0 0
        %270 = vmatprep.subr.bf16.mxu0 0
        %271 = vmatpush1.bf16.msra.mxu0 0
        %272 = vmatprep.subr.bf16.mxu0 0
        %273 = vmatpush1.bf16.msra.mxu0 0
        %274 = vmatprep.subr.bf16.mxu0 0
        %275 = vmatpush1.bf16.msra.mxu0 0
        %276 = vmatprep.subr.bf16.mxu0 0
        %277 = vmatpush1.bf16.msra.mxu0 0
        %278 = vmatprep.subr.bf16.mxu0 0
        %279 = vmatpush1.bf16.msra.mxu0 0
        %280 = vmatprep.subr.bf16.mxu0 0
        %281 = vmatpush1.bf16.msra.mxu0 0
        %282 = vmatprep.subr.bf16.mxu0 0
        %283 = vmatpush1.bf16.msra.mxu0 0
        %284 = vmatprep.subr.bf16.mxu0 0
        %285 = vmatpush1.bf16.msra.mxu0 0
        %286 = vmatprep.subr.bf16.mxu0 0
        %287 = vmatpush1.bf16.msra.mxu0 0
        %288 = vmatprep.subr.bf16.mxu0 0
        %289 = vmatpush1.bf16.msra.mxu0 0
        %290 = vmatprep.subr.bf16.mxu0 0
        %291 = vmatpush1.bf16.msra.mxu0 0
        %292 = vmatprep.subr.bf16.mxu0 0
        %293 = vmatpush1.bf16.msra.mxu0 0
        %294 = vmatprep.subr.bf16.mxu0 0
        %295 = vmatpush1.bf16.msra.mxu0 0
        %296 = vmatprep.mubr.bf16.mxu0 0
        %297 = vmatmul.mubr.bf16.gmra.mrb[0].mxu0 %v262
        %v298 = vpop.f32.mrb[0].mxu0
        %v299 = vadd.f32 0.0, %v298
        %v300 = vpop.f32.mrb[0].mxu0
        %v301 = vpop.f32.mrb[0].mxu0
        %v302 = vpop.f32.mrb[0].mxu0
        %303 = vdwg.mxu0
        %v304 = vpack.c.bf16 %v299, %v299
        %s305 = scalar_lea.vmem %s237, 16
        %v306 = vld [vmem:[%s305] sm:$0xf]
        %v307 = vld [vmem:[%s305 + $0x4] sm:$0xf]
        %v308 = vld [vmem:[%s305 + $0x8] sm:$0xf]
        %v309 = vld [vmem:[%s305 + $0xc] sm:$0xf]
        %v314 = vunpack.c.l.b16 %v306
        %v315 = vunpack.c.l.b16 %v307
        %v316 = vunpack.c.l.b16 %v308
        %v317 = vunpack.c.l.b16 %v309
        %v318 = vpack.c.b16 %v315, %v314
        %v319 = vpack.c.b16 %v317, %v316
        %322 = vmatprep.subr.bf16.mxu0 0
        %323 = vmatpush1.bf16.msra.mxu0 %v318
        %324 = vmatprep.subr.bf16.mxu0 0
        %325 = vmatpush1.bf16.msra.mxu0 %v319
        %326 = vmatprep.subr.bf16.mxu0 0
        %327 = vmatpush1.bf16.msra.mxu0 0
        %328 = vmatprep.subr.bf16.mxu0 0
        %329 = vmatpush1.bf16.msra.mxu0 0
        %330 = vmatprep.subr.bf16.mxu0 0
        %331 = vmatpush1.bf16.msra.mxu0 0
        %332 = vmatprep.subr.bf16.mxu0 0
        %333 = vmatpush1.bf16.msra.mxu0 0
        %334 = vmatprep.subr.bf16.mxu0 0
        %335 = vmatpush1.bf16.msra.mxu0 0
        %336 = vmatprep.subr.bf16.mxu0 0
        %337 = vmatpush1.bf16.msra.mxu0 0
        %338 = vmatprep.subr.bf16.mxu0 0
        %339 = vmatpush1.bf16.msra.mxu0 0
        %340 = vmatprep.subr.bf16.mxu0 0
        %341 = vmatpush1.bf16.msra.mxu0 0
        %342 = vmatprep.subr.bf16.mxu0 0
        %343 = vmatpush1.bf16.msra.mxu0 0
        %344 = vmatprep.subr.bf16.mxu0 0
        %345 = vmatpush1.bf16.msra.mxu0 0
        %346 = vmatprep.subr.bf16.mxu0 0
        %347 = vmatpush1.bf16.msra.mxu0 0
        %348 = vmatprep.subr.bf16.mxu0 0
        %349 = vmatpush1.bf16.msra.mxu0 0
        %350 = vmatprep.subr.bf16.mxu0 0
        %351 = vmatpush1.bf16.msra.mxu0 0
        %352 = vmatprep.subr.bf16.mxu0 0
        %353 = vmatpush1.bf16.msra.mxu0 0
        %354 = vmatprep.mubr.bf16.mxu0 0
        %355 = vmatmul.mubr.bf16.gmra.mrb[0].mxu0 %v262
        %v356 = vpop.f32.mrb[0].mxu0
        %v357 = vadd.f32 0.0, %v356
        %v358 = vpop.f32.mrb[0].mxu0
        %v359 = vpop.f32.mrb[0].mxu0
        %v360 = vpop.f32.mrb[0].mxu0
        %361 = vdwg.mxu0
        %v362 = vpack.c.bf16 %v357, %v357
        %s363 = scalar_lea.vmem %s237, 32
        %v364 = vld [vmem:[%s363] sm:$0xf]
        %v365 = vld [vmem:[%s363 + $0x4] sm:$0xf]
        %v366 = vld [vmem:[%s363 + $0x8] sm:$0xf]
        %v367 = vld [vmem:[%s363 + $0xc] sm:$0xf]
        %v372 = vunpack.c.l.b16 %v364
        %v373 = vunpack.c.l.b16 %v365
        %v374 = vunpack.c.l.b16 %v366
        %v375 = vunpack.c.l.b16 %v367
        %v376 = vpack.c.b16 %v373, %v372
        %v377 = vpack.c.b16 %v375, %v374
        %380 = vmatprep.subr.bf16.mxu0 0
        %381 = vmatpush1.bf16.msra.mxu0 %v376
        %382 = vmatprep.subr.bf16.mxu0 0
        %383 = vmatpush1.bf16.msra.mxu0 %v377
        %384 = vmatprep.subr.bf16.mxu0 0
        %385 = vmatpush1.bf16.msra.mxu0 0
        %386 = vmatprep.subr.bf16.mxu0 0
        %387 = vmatpush1.bf16.msra.mxu0 0
        %388 = vmatprep.subr.bf16.mxu0 0
        %389 = vmatpush1.bf16.msra.mxu0 0
        %390 = vmatprep.subr.bf16.mxu0 0
        %391 = vmatpush1.bf16.msra.mxu0 0
        %392 = vmatprep.subr.bf16.mxu0 0
        %393 = vmatpush1.bf16.msra.mxu0 0
        %394 = vmatprep.subr.bf16.mxu0 0
        %395 = vmatpush1.bf16.msra.mxu0 0
        %396 = vmatprep.subr.bf16.mxu0 0
        %397 = vmatpush1.bf16.msra.mxu0 0
        %398 = vmatprep.subr.bf16.mxu0 0
        %399 = vmatpush1.bf16.msra.mxu0 0
        %400 = vmatprep.subr.bf16.mxu0 0
        %401 = vmatpush1.bf16.msra.mxu0 0
        %402 = vmatprep.subr.bf16.mxu0 0
        %403 = vmatpush1.bf16.msra.mxu0 0
        %404 = vmatprep.subr.bf16.mxu0 0
        %405 = vmatpush1.bf16.msra.mxu0 0
        %406 = vmatprep.subr.bf16.mxu0 0
        %407 = vmatpush1.bf16.msra.mxu0 0
        %408 = vmatprep.subr.bf16.mxu0 0
        %409 = vmatpush1.bf16.msra.mxu0 0
        %410 = vmatprep.subr.bf16.mxu0 0
        %411 = vmatpush1.bf16.msra.mxu0 0
        %412 = vmatprep.mubr.bf16.mxu0 0
        %413 = vmatmul.mubr.bf16.gmra.mrb[0].mxu0 %v262
        %v414 = vpop.f32.mrb[0].mxu0
        %v415 = vadd.f32 0.0, %v414
        %v416 = vpop.f32.mrb[0].mxu0
        %v417 = vpop.f32.mrb[0].mxu0
        %v418 = vpop.f32.mrb[0].mxu0
        %419 = vdwg.mxu0
        %v420 = vpack.c.bf16 %v415, %v415
        %vm421 = vcmask 31744
        %v423 = vsel %vm421, %v304, 0
        %v426 = vsel %vm421, %v362, 0
        %428 = vmatprep.subr.bf16.mxu0 0
        %429 = vmatpush1.bf16.xpose.msra.mxu0 %v426
        %430 = vmatprep.subr.bf16.mxu0 0
        %431 = vmatpush1.bf16.xpose.msra.mxu0 0
        %432 = vmatprep.subr.bf16.mxu0 0
        %433 = vmatpush1.bf16.xpose.msra.mxu0 0
        %434 = vmatprep.subr.bf16.mxu0 0
        %435 = vmatpush1.bf16.xpose.msra.mxu0 0
        %436 = vmatprep.subr.bf16.mxu0 0
        %437 = vmatpush1.bf16.xpose.msra.mxu0 0
        %438 = vmatprep.subr.bf16.mxu0 0
        %439 = vmatpush1.bf16.xpose.msra.mxu0 0
        %440 = vmatprep.subr.bf16.mxu0 0
        %441 = vmatpush1.bf16.xpose.msra.mxu0 0
        %442 = vmatprep.subr.bf16.mxu0 0
        %443 = vmatpush1.bf16.xpose.msra.mxu0 0
        %444 = vmatprep.subr.bf16.mxu0 0
        %445 = vmatpush1.bf16.xpose.msra.mxu0 0
        %446 = vmatprep.subr.bf16.mxu0 0
        %447 = vmatpush1.bf16.xpose.msra.mxu0 0
        %448 = vmatprep.subr.bf16.mxu0 0
        %449 = vmatpush1.bf16.xpose.msra.mxu0 0
        %450 = vmatprep.subr.bf16.mxu0 0
        %451 = vmatpush1.bf16.xpose.msra.mxu0 0
        %452 = vmatprep.subr.bf16.mxu0 0
        %453 = vmatpush1.bf16.xpose.msra.mxu0 0
        %454 = vmatprep.subr.bf16.mxu0 0
        %455 = vmatpush1.bf16.xpose.msra.mxu0 0
        %456 = vmatprep.subr.bf16.mxu0 0
        %457 = vmatpush1.bf16.xpose.msra.mxu0 0
        %458 = vmatprep.subr.bf16.mxu0 0
        %459 = vmatpush1.bf16.xpose.msra.mxu0 0
        %460 = vmatprep.mubr.bf16.mxu0 0
        %461 = vmatmul.mubr.bf16.gmra.mrb[0].mxu0 %v423
        %v462 = vpop.f32.mrb[0].mxu0
        %v463 = vadd.f32 0.0, %v462
        %v464 = vpop.f32.mrb[0].mxu0
        %v465 = vpop.f32.mrb[0].mxu0
        %v466 = vpop.f32.mrb[0].mxu0
        %467 = vdwg.mxu0
        %v468 = vmul.f32 %v463, 0.5
        %vm469 = vcmask 64512
        %v470 = vsel %vm469, %v468, -inf
        %471 = vmax.xlane.f32.xlu0 %v470
        %v472 = vpop.xlane.xlu0 %471
        %v473 = vsub.f32 %v468, %v472
        %v474 = vmul.f32 %v473, 1.442695
        %v475 = vpow.pop %v474
        %v476 = vsel %vm469, %v475, 0.0
        %477 = vadd.xlane.f32.xlu0 %v476
        %v478 = vpop.xlane.xlu0 %477
        %v479 = vrcp.pop %v478
        %v480 = vmul.f32 %v475, %v479
        %v481 = vpack.c.bf16 %v480, %v480
        %v483 = vsel %vm469, %v481, 0
        %vm485 = vcmask 1043456
        %v487 = vsel %vm485, %v420, 0
        %489 = vmatprep.subr.bf16.mxu0 0
        %490 = vmatpush1.bf16.msra.mxu0 %v487
        %491 = vmatprep.subr.bf16.mxu0 0
        %492 = vmatpush1.bf16.msra.mxu0 0
        %493 = vmatprep.subr.bf16.mxu0 0
        %494 = vmatpush1.bf16.msra.mxu0 0
        %495 = vmatprep.subr.bf16.mxu0 0
        %496 = vmatpush1.bf16.msra.mxu0 0
        %497 = vmatprep.subr.bf16.mxu0 0
        %498 = vmatpush1.bf16.msra.mxu0 0
        %499 = vmatprep.subr.bf16.mxu0 0
        %500 = vmatpush1.bf16.msra.mxu0 0
        %501 = vmatprep.subr.bf16.mxu0 0
        %502 = vmatpush1.bf16.msra.mxu0 0
        %503 = vmatprep.subr.bf16.mxu0 0
        %504 = vmatpush1.bf16.msra.mxu0 0
        %505 = vmatprep.subr.bf16.mxu0 0
        %506 = vmatpush1.bf16.msra.mxu0 0
        %507 = vmatprep.subr.bf16.mxu0 0
        %508 = vmatpush1.bf16.msra.mxu0 0
        %509 = vmatprep.subr.bf16.mxu0 0
        %510 = vmatpush1.bf16.msra.mxu0 0
        %511 = vmatprep.subr.bf16.mxu0 0
        %512 = vmatpush1.bf16.msra.mxu0 0
        %513 = vmatprep.subr.bf16.mxu0 0
        %514 = vmatpush1.bf16.msra.mxu0 0
        %515 = vmatprep.subr.bf16.mxu0 0
        %516 = vmatpush1.bf16.msra.mxu0 0
        %517 = vmatprep.subr.bf16.mxu0 0
        %518 = vmatpush1.bf16.msra.mxu0 0
        %519 = vmatprep.subr.bf16.mxu0 0
        %520 = vmatpush1.bf16.msra.mxu0 0
        %521 = vmatprep.mubr.bf16.mxu0 0
        %522 = vmatmul.mubr.bf16.gmra.mrb[0].mxu0 %v483
        %v523 = vpop.f32.mrb[0].mxu0
        %v524 = vadd.f32 0.0, %v523
        %v525 = vpop.f32.mrb[0].mxu0
        %v526 = vpop.f32.mrb[0].mxu0
        %v527 = vpop.f32.mrb[0].mxu0
        %528 = vdwg.mxu0
        %v529 = vpack.c.bf16 %v524, %v524
        %v530 = vld [vmem:[%s241] sm:$0x3]
        %v532 = vsel %vm421, %v529, 0
        %vm534 = vcmask 1041408
        %v536 = vsel %vm534, %v530, 0
        %538 = vmatprep.subr.bf16.mxu0 0
        %539 = vmatpush1.bf16.msra.mxu0 %v536
        %540 = vmatprep.subr.bf16.mxu0 0
        %541 = vmatpush1.bf16.msra.mxu0 0
        %542 = vmatprep.subr.bf16.mxu0 0
        %543 = vmatpush1.bf16.msra.mxu0 0
        %544 = vmatprep.subr.bf16.mxu0 0
        %545 = vmatpush1.bf16.msra.mxu0 0
        %546 = vmatprep.subr.bf16.mxu0 0
        %547 = vmatpush1.bf16.msra.mxu0 0
        %548 = vmatprep.subr.bf16.mxu0 0
        %549 = vmatpush1.bf16.msra.mxu0 0
        %550 = vmatprep.subr.bf16.mxu0 0
        %551 = vmatpush1.bf16.msra.mxu0 0
        %552 = vmatprep.subr.bf16.mxu0 0
        %553 = vmatpush1.bf16.msra.mxu0 0
        %554 = vmatprep.subr.bf16.mxu0 0
        %555 = vmatpush1.bf16.msra.mxu0 0
        %556 = vmatprep.subr.bf16.mxu0 0
        %557 = vmatpush1.bf16.msra.mxu0 0
        %558 = vmatprep.subr.bf16.mxu0 0
        %559 = vmatpush1.bf16.msra.mxu0 0
        %560 = vmatprep.subr.bf16.mxu0 0
        %561 = vmatpush1.bf16.msra.mxu0 0
        %562 = vmatprep.subr.bf16.mxu0 0
        %563 = vmatpush1.bf16.msra.mxu0 0
        %564 = vmatprep.subr.bf16.mxu0 0
        %565 = vmatpush1.bf16.msra.mxu0 0
        %566 = vmatprep.subr.bf16.mxu0 0
        %567 = vmatpush1.bf16.msra.mxu0 0
        %568 = vmatprep.subr.bf16.mxu0 0
        %569 = vmatpush1.bf16.msra.mxu0 0
        %570 = vmatprep.mubr.bf16.mxu0 0
        %571 = vmatmul.mubr.bf16.gmra.mrb[0].mxu0 %v532
        %v572 = vpop.f32.mrb[0].mxu0
        %v573 = vadd.f32 0.0, %v572
        %v574 = vpop.f32.mrb[0].mxu0
        %v575 = vpop.f32.mrb[0].mxu0
        %v576 = vpop.f32.mrb[0].mxu0
        %577 = vdwg.mxu0
        %p578 = scmp.eq.s32.totalorder %s23, 0
        // Predicated region
        $region37: #{tpu_custom_call.1} parent=35 // pred_check
          %p579 = pneg %p578
        $region38: #{tpu_custom_call.1} parent=35 // pred_check_branch
          %581 = sbr.rel (%p579) target = $region40
        $region39: #{tpu_custom_call.1} parent=35 // pred_region
          %582 = vst.msk [vmem:[#allocation2] sm:$0xff] %vm260, 0.0
        $region40: #{tpu_custom_call.1} parent=35 // pred_fallthru
          _
        %v583 = vld [vmem:[#allocation2] sm:$0xff]
        %v584 = vadd.f32 %v583, %v573
        %585 = vst.msk [vmem:[#allocation2] sm:$0xff] %vm260, %v584
        %p586 = scmp.eq.s32.totalorder %s23, 7
        // Predicated region
        $region41: #{tpu_custom_call.1} parent=35 // pred_check
          %p587 = pneg %p586
        $region42: #{tpu_custom_call.1} parent=35 // pred_check_branch
          %589 = sbr.rel (%p587) target = $region44
        $region43: #{tpu_custom_call.1} parent=35 // pred_region
          %v590 = vld [vmem:[#allocation2] sm:$0xff]
          %v591 = vld [vmem:[%s3] sm:$0x1]
          %v593 = vlaneseq
          %v594 = vshrl.u32 %v593, 7
          %v595 = vsub.s32 0, %v594
          %v596 = vrot.slane %v591, %v595
          %v598 = vadd.f32 %v590, %v596
          %599 = vst.msk [vmem:[%s228] sm:$0xff] %vm260, %v598
        $region44: #{tpu_custom_call.1} parent=35 // pred_fallthru
          _
        %s600 = sand.u32 %s137, 1
        %s601 = scalar_lea.sflag [#allocation4], %s600
        %s602 = sand.u32 %s137, 1
        %s603 = smul.addr %s602, 8
        %s604 = scalar_lea.vmem [#allocation3], %s603
        // Predicated region
        $region45: #{tpu_custom_call.1} parent=35 // pred_check
          %p605 = pneg %p147
        $region46: #{tpu_custom_call.1} parent=35 // pred_check_branch
          %607 = sbr.rel (%p605) target = $region48
        $region47: #{tpu_custom_call.1} parent=35 // pred_region
          %s609 = ssub.s32 128, 128
          %610 = vsyncadd %s601, %s609
          %s611 = smul.addr %s22, 128
          %s612 = scalar_lea.hbm %s4, %s611
          %s614 = sshll.u32 %s604, 4
          %s615 = int_to_ptr.vmem [resolvable:$true] %s614
          %617 = dma.vmem_to_hbm [thread:$0]  %s615, 128, %s612, %s601
        $region48: #{tpu_custom_call.1} parent=35 // pred_fallthru
          _
      $region36: #{tpu_custom_call.1} parent=5 // pred_fallthru
        _
      %p618 = scmp.le.s32.totalorder 2, %s13
      // Predicated region
      $region49: #{tpu_custom_call.1} parent=5 // pred_check
        %p619 = pneg %p618
      $region50: #{tpu_custom_call.1} parent=5 // pred_check_branch
        %621 = sbr.rel (%p619) target = $region52
      $region51: #{tpu_custom_call.1} parent=5 // pred_region
        %s622 = ssub.s32 %s13, 2
        // Predicated region
        $region53: #{tpu_custom_call.1} parent=51 // pred_check
          %p623 = pneg %p153
        $region54: #{tpu_custom_call.1} parent=51 // pred_check_branch
          %625 = sbr.rel (%p623) target = $region56
        $region55: #{tpu_custom_call.1} parent=51 // pred_region
          %s626 = sand.u32 %s138, 1
          %s627 = scalar_lea.sflag [#allocation4], %s626
          %s628 = sand.u32 %s138, 1
          %s629 = smul.addr %s628, 8
          %s630 = scalar_lea.vmem [#allocation3], %s629
          %631 = dma.done %s627, 128
        $region56: #{tpu_custom_call.1} parent=51 // pred_fallthru
          _
      $region52: #{tpu_custom_call.1} parent=5 // pred_fallthru
        _
    $region6: #{tpu_custom_call.1} parent=1 // loop_footer
      %s17 = sadd.s32 1, %s13
    $region7: #{tpu_custom_call.1} parent=1 // loop_footer_branch
      %12 = sbr.rel target = $region3
    $region8: #{tpu_custom_call.1} parent=1 // loop_exit
      _
    %632 = vsyncpa [#allocation4], 1
    %s633 = scalar_lea.sflag [#allocation4], 1
    %634 = vsyncpa %s633, 1

</llo_original>
